<compile_context>
chip_gen: v7x
topology: tpu7x:2x2x1
jax: 0.10.0
libtpu: 0.0.40
codegen_flags: <defaults>
</compile_context>

<pallas_src>
from typing import NamedTuple

import jax
import jax.numpy as jnp
from jax.experimental import pallas as pl
from jax.experimental.pallas import tpu as pltpu


def _round_up(x, m):
    return ((x + m - 1) // m) * m


def _vmem_limit_bytes():
    # ~75% of physical VMEM: 48 MiB on v7x (64 MiB), 96 MiB on v5e/v6e (128 MiB).
    cap = 64 * 1024 * 1024
    try:
        cap = int(getattr(pltpu.get_tpu_info(), "vmem_capacity_bytes", cap))
    except Exception:
        pass
    return min((cap * 3) // 4, 112 * 1024 * 1024)


def _linear_tanh_kernel(x_ref, w_ref, b_ref, o_ref):
    # x_ref: (tm, L)  lane-packed token rows (bf16)
    # w_ref: (L, L)   block-diagonal weight, resident across grid steps (bf16)
    # b_ref: (1, L)   lane-tiled bias, resident (f32)
    # o_ref: (tm, L)  output rows (bf16)
    y = jnp.dot(x_ref[...], w_ref[...], preferred_element_type=jnp.float32)
    y = jnp.tanh(y + b_ref[...].astype(jnp.float32))   # f32 VPU/EUP (v5e-safe)
    o_ref[...] = y.astype(o_ref.dtype)


def _linear_tanh(x_rows, w, b):
    """Row-wise tanh(x @ w + b).  x_rows: (R, L), w: (L, L), b: (1, L) f32."""
    R, L = x_rows.shape
    sub = {4: 8, 2: 16, 1: 32}.get(jnp.dtype(x_rows.dtype).itemsize, 8)
    # Fixed large row tile (<=512 rows, sublane-aligned), but never so large
    # that the grid collapses to one step when >=2 tiles of work exist
    # (keeps both v7x TensorCores busy via dimension_semantics='parallel').
    tm = min(512, _round_up(max(pl.cdiv(R, 2), sub), sub))
    R_pad = _round_up(R, tm)
    if R_pad != R:
        # Zero padding -> padded rows compute tanh(b): finite, sliced off below.
        x_rows = jnp.pad(x_rows, ((0, R_pad - R), (0, 0)))
    grid = (R_pad // tm,)

    out = pl.pallas_call(
        _linear_tanh_kernel,
        out_shape=jax.ShapeDtypeStruct((R_pad, L), x_rows.dtype),
        grid_spec=pltpu.PrefetchScalarGridSpec(
            num_scalar_prefetch=0,
            grid=grid,
            in_specs=[
                pl.BlockSpec((tm, L), lambda i: (i, 0)),        # token rows (tiled)
                pl.BlockSpec((L, L), lambda i: (0, 0),
                             pipeline_mode=pl.Buffered(1)),     # weight (resident)
                pl.BlockSpec((1, L), lambda i: (0, 0),
                             pipeline_mode=pl.Buffered(1)),     # bias (resident)
            ],
            out_specs=pl.BlockSpec((tm, L), lambda i: (i, 0)),
        ),
        compiler_params=pltpu.CompilerParams(
            dimension_semantics=("parallel",),   # shards row tiles across TCs (v7x)
            vmem_limit_bytes=_vmem_limit_bytes(),
        ),
    )(x_rows, w, b)
    return out[:R] if R_pad != R else out


class MemoryCellParams(NamedTuple):
    w: jax.Array        # (E, E)  compute-dtype weight (tiny-workload XLA path)
    b: jax.Array        # (1, E)  f32 bias
    w_k: jax.Array      # (L, L)  lane-packed block-diagonal kernel weight
    b_k: jax.Array      # (1, L)  f32 lane-tiled kernel bias
    pack: int           # tokens packed per 128-lane row
    emb_dim: int


def prepare_params(w, b, *, compute_dtype=jnp.bfloat16):
    """One-time weight preparation (hoisted out of the per-step forward)."""
    E = w.shape[0]
    if E % 128 == 0:
        pack = 1
    elif 128 % E == 0:
        pack = 128 // E           # lane-pack `pack` tokens per 128-lane row
    else:
        pack = 1
        # TODO(synk): E neither divides nor is a multiple of 128 -> lane-sparse
        # stores; pad E to a multiple of 128 for full lane occupancy.
    b_f32 = b.astype(jnp.float32).reshape(1, E)
    if pack > 1:
        # kron(I_pack, W): applies W independently to each packed token.
        w_k = jnp.kron(jnp.eye(pack, dtype=w.dtype), w).astype(compute_dtype)
        b_k = jnp.tile(b_f32, (1, pack))
    else:
        w_k, b_k = w.astype(compute_dtype), b_f32
    return MemoryCellParams(w=w.astype(compute_dtype), b=b_f32,
                            w_k=w_k, b_k=b_k, pack=pack, emb_dim=E)


def _pack_rows(tok2d, pack, L):
    """(N, E) tokens -> (ceil(N/pack), L) lane-dense rows (contiguous reshape)."""
    if pack == 1:
        return tok2d
    n = tok2d.shape[0]
    n_pad = _round_up(n, pack)
    if n_pad != n:
        tok2d = jnp.pad(tok2d, ((0, n_pad - n), (0, 0)))
    return tok2d.reshape(n_pad // pack, L)


def memory_cell_forward(input_embeds, memory_param, params, memory_state=None,
                        *, broadcast_memory=True, xla_fallback_rows=64):
    """MemoryCell.forward: base_model(concat([memory, x], 1)) -> (out, new_mem).

    input_embeds: (B, S, E); memory_param: (1, M, E); optional explicit
    memory_state: (B, M, E).  Returns out (B, S, E) and new_memory_state
    (B, M, E) — or (1, M, E) if memory_state is None and broadcast_memory is
    False — in the kernel compute dtype (bf16 by default).
    """
    B, S, E = input_embeds.shape
    cd = params.w_k.dtype
    pack = params.pack
    L = E * pack

    # Memory tokens are batch-invariant when no explicit state is passed ->
    # compute them once and (optionally) broadcast, instead of B times.
    mem_src = memory_param if memory_state is None else memory_state
    Bm, M, _ = mem_src.shape

    x_flat = input_embeds.reshape(B * S, E).astype(cd)
    m_flat = mem_src.reshape(Bm * M, E).astype(cd)
    n_x, n_m = x_flat.shape[0], m_flat.shape[0]

    if pl.cdiv(n_x + n_m, pack) < xla_fallback_rows:
        # Tiny workload: kernel dispatch/pipeline cost dominates -> let XLA
        # fuse the matmul + tanh.
        tok = jnp.concatenate([x_flat, m_flat], axis=0)
        y = jnp.tanh(jnp.dot(tok, params.w, preferred_element_type=jnp.float32)
                     + params.b).astype(cd)
        out_flat, mem_flat = y[:n_x], y[n_x:]
    else:
        # Lane-dense packed rows; memory rows ride the same grid -> a single
        # pallas_call per forward step.
        x_rows = _pack_rows(x_flat, pack, L)
        m_rows = _pack_rows(m_flat, pack, L)
        rows = jnp.concatenate([x_rows, m_rows], axis=0)
        y_rows = _linear_tanh(rows, params.w_k, params.b_k)
        rx = x_rows.shape[0]
        out_flat = y_rows[:rx].reshape(-1, E)[:n_x]
        mem_flat = y_rows[rx:].reshape(-1, E)[:n_m]

    out = out_flat.reshape(B, S, E)
    new_memory_state = mem_flat.reshape(Bm, M, E)
    if memory_state is None and broadcast_memory:
        # Module semantics return per-batch memory; set broadcast_memory=False
        # to avoid materializing B identical copies when the consumer allows.
        new_memory_state = jnp.broadcast_to(new_memory_state, (B, M, E))
    return out, new_memory_state


if __name__ == "__main__":
    # Small but non-degenerate shapes so the Pallas path (not the tiny-workload
    # XLA fallback) is exercised: 129 packed rows -> 2 'parallel' grid steps.
    B, S, E = 4, 128, 32      # batch, seq len, embedding dim
    M = 4                     # num_mem_tokens

    key = jax.random.PRNGKey(0)
    k_mem, k_x, k_w, k_b = jax.random.split(key, 4)

    # kaiming_normal_ on (1, M, E): fan_in = M*E, std = sqrt(2 / fan_in).
    mem_std = (2.0 / (M * E)) ** 0.5
    memory_param = mem_std * jax.random.normal(k_mem, (1, M, E), dtype=jnp.float32)

    # Base-model (token-wise linear) parameters, deterministic.
    w = (1.0 / (E ** 0.5)) * jax.random.normal(k_w, (E, E), dtype=jnp.float32)
    b = 0.01 * jax.random.normal(k_b, (1, E), dtype=jnp.float32)

    # `input_ids` in the reference module are already embeddings.
    input_embeds = jax.random.normal(k_x, (B, S, E), dtype=jnp.float32)

    # Weight prep (kron / tile / bf16 cast) hoisted out of the forward step.
    params = prepare_params(w, b, compute_dtype=jnp.bfloat16)

    out, new_memory_state = memory_cell_forward(input_embeds, memory_param, params)
    jax.block_until_ready((out, new_memory_state))

    # Pure-JAX f32 reference for a sanity check (bf16 I/O -> loose tolerance).
    mem_b = jnp.broadcast_to(memory_param, (B, M, E))
    full_ref = jnp.tanh(
        jnp.concatenate([mem_b, input_embeds], axis=1) @ w + b[None, :, :])
    ref_out, ref_mem = full_ref[:, M:, :], full_ref[:, :M, :]
    assert out.shape == (B, S, E) and new_memory_state.shape == (B, M, E)
    assert jnp.allclose(out.astype(jnp.float32), ref_out, atol=4e-2, rtol=4e-2)
    assert jnp.allclose(new_memory_state.astype(jnp.float32), ref_mem,
                        atol=4e-2, rtol=4e-2)

    print("KERNEL_OK")
</pallas_src>

<mosaic_0001>
module attributes {stable_mosaic.version = 11 : i64} {
  func.func @_linear_tanh_kernel(%arg0: i32, %arg1: memref<80x128xbf16, #tpu.memory_space<vmem>>, %arg2: memref<128x128xbf16, #tpu.memory_space<vmem>>, %arg3: memref<1x128xf32, #tpu.memory_space<vmem>>, %arg4: memref<80x128xbf16, #tpu.memory_space<vmem>>) attributes {dimension_semantics = [#tpu.dimension_semantics<parallel>], iteration_bounds = array<i64: 2>, scalar_prefetch = 0 : i64, scratch_operands = 0 : i64, tpu.core_type = #tpu.core_type<tc>, window_params = [{transform_indices = @transform_0, window_bounds = array<i64: 80, 128>}, {pipeline_mode = #tpu.pipeline_mode<synchronous>, transform_indices = @transform_1, window_bounds = array<i64: 128, 128>}, {pipeline_mode = #tpu.pipeline_mode<synchronous>, transform_indices = @transform_2, window_bounds = array<i64: 1, 128>}, {transform_indices = @transform_3, window_bounds = array<i64: 80, 128>}]} {
    %c0 = arith.constant 0 : index
    %c0_0 = arith.constant 0 : index
    %0 = vector.load %arg1[%c0, %c0_0] : memref<80x128xbf16, #tpu.memory_space<vmem>>, vector<80x128xbf16>
    %c0_1 = arith.constant 0 : index
    %c0_2 = arith.constant 0 : index
    %1 = vector.load %arg2[%c0_1, %c0_2] : memref<128x128xbf16, #tpu.memory_space<vmem>>, vector<128x128xbf16>
    %cst = arith.constant dense<0.000000e+00> : vector<80x128xf32>
    %2 = tpu.matmul %0, %1, %cst {dimension_numbers = #tpu.dot_dimension_numbers<[1], [0], [0], [1], [0, 0, 1, 1], [], []>} : vector<80x128xbf16>, vector<128x128xbf16>, vector<80x128xf32> -> vector<80x128xf32>
    %c0_3 = arith.constant 0 : index
    %c0_4 = arith.constant 0 : index
    %3 = vector.load %arg3[%c0_3, %c0_4] : memref<1x128xf32, #tpu.memory_space<vmem>>, vector<1x128xf32>
    %4 = vector.broadcast %3 : vector<1x128xf32> to vector<80x128xf32>
    %5 = arith.addf %2, %4 : vector<80x128xf32>
    %6 = math.tanh %5 : vector<80x128xf32>
    %7 = arith.truncf %6 : vector<80x128xf32> to vector<80x128xbf16>
    %c0_5 = arith.constant 0 : index
    %c0_6 = arith.constant 0 : index
    %8 = vector.load %arg4[%c0_5, %c0_6] : memref<80x128xbf16, #tpu.memory_space<vmem>>, vector<80x128xbf16>
    tpu.vector_store %arg4[%c0_5, %c0_6], %7 {strides = array<i32>} : memref<80x128xbf16, #tpu.memory_space<vmem>>, vector<80x128xbf16>,
    return
  }
  func.func @transform_0(%arg0: i32) -> (i32, i32) {
    %c0_i32 = arith.constant 0 : i32
    %c0_i32_0 = arith.constant 0 : i32
    return %arg0, %c0_i32 : i32, i32
  }
  func.func @transform_1(%arg0: i32) -> (i32, i32) {
    %c0_i32 = arith.constant 0 : i32
    %c0_i32_0 = arith.constant 0 : i32
    %c0_i32_1 = arith.constant 0 : i32
    return %c0_i32, %c0_i32_0 : i32, i32
  }
  func.func @transform_2(%arg0: i32) -> (i32, i32) {
    %c0_i32 = arith.constant 0 : i32
    %c0_i32_0 = arith.constant 0 : i32
    %c0_i32_1 = arith.constant 0 : i32
    return %c0_i32, %c0_i32_0 : i32, i32
  }
  func.func @transform_3(%arg0: i32) -> (i32, i32) {
    %c0_i32 = arith.constant 0 : i32
    %c0_i32_0 = arith.constant 0 : i32
    return %arg0, %c0_i32 : i32, i32
  }
}

</mosaic_0001>

<llo_original>
// kernel: tpu_custom_call.1
$region0: #{tpu_custom_call.1}
  #allocation0 [shape = 'u32[]', space=smem, size = 0x4, offset = 0x4, fixed_abs, tag = 'smem constant byte address 0x4 - core index']
  #allocation1 [shape = 'u32[144,128]{1,0:T(1,128)}', space=vmem, size = 0x12000, scoped, tag = 'internal scratch']
  %s0 = inlined_call_operand.hbm [shape: bf16[160,128], index: 0, kind: input, shape index: {}]
  %s1 = inlined_call_operand.hbm [shape: bf16[128,128], index: 1, kind: input, shape index: {}]
  %s2 = inlined_call_operand.vmem [shape: f32[1,128], index: 2, kind: input, shape index: {}]
  %s3 = inlined_call_operand.hbm [shape: bf16[160,128], index: 3, kind: output, shape index: {}]
  %s4 = sld [smem:[#allocation0]]
  $region53: #{tpu_custom_call.1} parent=0
    _
  %s6 = ssub.s32 1, %s4
  %s7 = scalar_select 0, %s6, %s4
  $region1: #{tpu_custom_call.1} parent=0
    #allocation2 [shape = 'u8[40960]{0}', space=vmem, size = 0xa000, scoped, tag = 'input window, operand 0']
    #allocation3 [shape = 's32[2]{0}', space=sflag, size = 0x8, scoped, tag = 'scoped memory for tpu_custom_call.1']
    #allocation4 [shape = 's32[2]{0}', space=sflag, size = 0x8, scoped, tag = 'scoped memory for tpu_custom_call.1']
    #allocation5 [shape = 'u8[32768]{0}', space=vmem, size = 0x8000, scoped, tag = 'input window, operand 1, single buffered']
    #allocation6 [shape = 's32[1]{0}', space=sflag, size = 0x4, scoped, tag = 'scoped memory for tpu_custom_call.1']
    #allocation7 [shape = 'u8[40960]{0}', space=vmem, size = 0xa000, scoped, tag = 'output window, operand 0']
    %8 = vsyncpa [#allocation3], 0
    %s9 = scalar_lea.sflag [#allocation3], 1
    %10 = vsyncpa %s9, 0
    %11 = vsyncpa [#allocation6], 0
    %12 = vsyncpa [#allocation4], 0
    %s13 = scalar_lea.sflag [#allocation4], 1
    %14 = vsyncpa %s13, 0
    loop: start=0, step=1, limit=4
    $region2: #{tpu_custom_call.1} parent=1 // loop_pre_header
      _
    $region3: #{tpu_custom_call.1} parent=1 // loop_header
      %s16 = sphi 0, %s20
      %p17 = scmp.ge.s32.totalorder %s16, 4
      %s26 = sphi 0, %s28
      %s29 = sphi 0, %s26
      %s30 = sphi 0, %s29
      %s46 = sphi 0, %s30
      %s50 = sphi 0, %s50
      %s52 = sphi 0, %s50
      %s53 = sphi 0, %s52
      %s67 = sphi 0, %s53
      %s71 = sphi 0, %s71
      %s73 = sphi 0, %s71
      %s74 = sphi 0, %s73
      %s88 = sphi 0, %s74
      %s94 = sphi 0, %s96
      %s97 = sphi 0, %s94
      %s98 = sphi 0, %s97
      %s114 = sphi 0, %s98
    $region4: #{tpu_custom_call.1} parent=1 // loop_header_branch
      %19 = sbr.rel (%p17) target = $region8
    $region5: #{tpu_custom_call.1} parent=1 // loop_body
      %s21 = ssub.s32 %s16, 1
      %s22 = ssub.s32 %s16, 2
      %s23 = sadd.s32 %s16, 1
      %s24 = ssub.s32 %s16, %s23
      %p25 = scmp.eq.s32.totalorder %s24, 0
      %s27 = sadd.s32 %s26, 1
      %s28 = scalar_select %p25, %s26, %s27
      %p31 = pneg %p25
      %p32 = scmp.eq.s32.totalorder %s16, 1
      %p33 = por %p31, %p32
      %p34 = scmp.ne.s32.totalorder %s26, %s29
      %p35 = scmp.eq.s32.totalorder %s16, 0
      %p36 = por %p34, %p35
      %p37 = scmp.ne.s32.totalorder %s26, %s29
      %p38 = scmp.eq.s32.totalorder %s21, 1
      %p39 = por %p37, %p38
      %p40 = scmp.ne.s32.totalorder %s29, %s30
      %p41 = scmp.eq.s32.totalorder %s21, 0
      %p42 = por %p40, %p41
      %p43 = scmp.ne.s32.totalorder %s29, %s30
      %p44 = scmp.eq.s32.totalorder %s22, 1
      %p45 = por %p43, %p44
      %p47 = scmp.ne.s32.totalorder %s30, %s46
      %p48 = scmp.eq.s32.totalorder %s22, 0
      %p49 = por %p47, %p48
      %s51 = sadd.s32 %s50, 1
      %p54 = scmp.eq.s32.totalorder %s16, 1
      %p55 = scmp.ne.s32.totalorder %s50, %s52
      %p56 = scmp.eq.s32.totalorder %s16, 0
      %p57 = por %p55, %p56
      %p58 = scmp.ne.s32.totalorder %s50, %s52
      %p59 = scmp.eq.s32.totalorder %s21, 1
      %p60 = por %p58, %p59
      %p61 = scmp.ne.s32.totalorder %s52, %s53
      %p62 = scmp.eq.s32.totalorder %s21, 0
      %p63 = por %p61, %p62
      %p64 = scmp.ne.s32.totalorder %s52, %s53
      %p65 = scmp.eq.s32.totalorder %s22, 1
      %p66 = por %p64, %p65
      %p68 = scmp.ne.s32.totalorder %s53, %s67
      %p69 = scmp.eq.s32.totalorder %s22, 0
      %p70 = por %p68, %p69
      %s72 = sadd.s32 %s71, 1
      %p75 = scmp.eq.s32.totalorder %s16, 1
      %p76 = scmp.ne.s32.totalorder %s71, %s73
      %p77 = scmp.eq.s32.totalorder %s16, 0
      %p78 = por %p76, %p77
      %p79 = scmp.ne.s32.totalorder %s71, %s73
      %p80 = scmp.eq.s32.totalorder %s21, 1
      %p81 = por %p79, %p80
      %p82 = scmp.ne.s32.totalorder %s73, %s74
      %p83 = scmp.eq.s32.totalorder %s21, 0
      %p84 = por %p82, %p83
      %p85 = scmp.ne.s32.totalorder %s73, %s74
      %p86 = scmp.eq.s32.totalorder %s22, 1
      %p87 = por %p85, %p86
      %p89 = scmp.ne.s32.totalorder %s74, %s88
      %p90 = scmp.eq.s32.totalorder %s22, 0
      %p91 = por %p89, %p90
      %s92 = ssub.s32 %s16, %s23
      %p93 = scmp.eq.s32.totalorder %s92, 0
      %s95 = sadd.s32 %s94, 1
      %s96 = scalar_select %p93, %s94, %s95
      %p99 = pneg %p93
      %p100 = scmp.eq.s32.totalorder %s16, 1
      %p101 = por %p99, %p100
      %p102 = scmp.ne.s32.totalorder %s94, %s97
      %p103 = scmp.eq.s32.totalorder %s16, 0
      %p104 = por %p102, %p103
      %p105 = scmp.ne.s32.totalorder %s94, %s97
      %p106 = scmp.eq.s32.totalorder %s21, 1
      %p107 = por %p105, %p106
      %p108 = scmp.ne.s32.totalorder %s97, %s98
      %p109 = scmp.eq.s32.totalorder %s21, 0
      %p110 = por %p108, %p109
      %p111 = scmp.ne.s32.totalorder %s97, %s98
      %p112 = scmp.eq.s32.totalorder %s22, 1
      %p113 = por %p111, %p112
      %p115 = scmp.ne.s32.totalorder %s98, %s114
      %p116 = scmp.eq.s32.totalorder %s22, 0
      %p117 = por %p115, %p116
      %p118 = scmp.le.s32.totalorder 1, %s16
      %p119 = scmp.lt.s32.totalorder %s16, 3
      %p120 = pnand %p118, %p119
      %p121 = pneg %p120
      // Predicated region
      $region9: #{tpu_custom_call.1} parent=5 // pred_check
        _
      $region10: #{tpu_custom_call.1} parent=5 // pred_check_branch
        %123 = sbr.rel (%p120) target = $region12
      $region11: #{tpu_custom_call.1} parent=5 // pred_region
        %s124 = ssub.s32 %s16, 1
        // Predicated region
        $region13: #{tpu_custom_call.1} parent=11 // pred_check
          %p125 = pneg %p63
        $region14: #{tpu_custom_call.1} parent=11 // pred_check_branch
          %127 = sbr.rel (%p125) target = $region16
        $region15: #{tpu_custom_call.1} parent=11 // pred_region
          %s129 = ssub.s32 1024, 1024
          %130 = vsyncadd [#allocation6], %s129
          %s131 = sshll.u32 [#allocation5], 4
          %s132 = int_to_ptr.vmem [resolvable:$true] %s131
          %137 = dma.hbm_to_vmem [thread:$0]  %s1, 1024, %s132, [#allocation6], 64, 64, 4
        $region16: #{tpu_custom_call.1} parent=11 // pred_fallthru
          _
        // Predicated region
        $region17: #{tpu_custom_call.1} parent=11 // pred_check
          %p138 = pneg %p84
        $region18: #{tpu_custom_call.1} parent=11 // pred_check_branch
          %140 = sbr.rel (%p138) target = $region20
        $region19: #{tpu_custom_call.1} parent=11 // pred_region
          _
        $region20: #{tpu_custom_call.1} parent=11 // pred_fallthru
          _
      $region12: #{tpu_custom_call.1} parent=5 // pred_fallthru
        _
      %p141 = scmp.lt.s32.totalorder %s16, 2
      // Predicated region
      $region21: #{tpu_custom_call.1} parent=5 // pred_check
        %p142 = pneg %p141
      $region22: #{tpu_custom_call.1} parent=5 // pred_check_branch
        %144 = sbr.rel (%p142) target = $region24
      $region23: #{tpu_custom_call.1} parent=5 // pred_region
        // Predicated region
        $region25: #{tpu_custom_call.1} parent=23 // pred_check
          %p145 = pneg %p36
        $region26: #{tpu_custom_call.1} parent=23 // pred_check_branch
          %147 = sbr.rel (%p145) target = $region28
        $region27: #{tpu_custom_call.1} parent=23 // pred_region
          %s148 = sand.u32 %s26, 1
          %s149 = scalar_lea.sflag [#allocation3], %s148
          %s150 = sand.u32 %s26, 1
          %s151 = smul.addr %s150, 40
          %s152 = scalar_lea.vmem [#allocation2], %s151
          %s153 = smul.u32 10, %s16
          %s155 = ssub.s32 640, 640
          %156 = vsyncadd %s149, %s155
          %s157 = smul.addr %s153, 64
          %s158 = scalar_lea.hbm %s0, %s157
          %s159 = sshll.u32 %s152, 4
          %s160 = int_to_ptr.vmem [resolvable:$true] %s159
          %165 = dma.hbm_to_vmem [thread:$0]  %s158, 640, %s160, %s149, 64, 64, 4
        $region28: #{tpu_custom_call.1} parent=23 // pred_fallthru
          _
      $region24: #{tpu_custom_call.1} parent=5 // pred_fallthru
        _
      %p166 = scmp.le.s32.totalorder 1, %s16
      %p167 = scmp.lt.s32.totalorder %s16, 3
      %p168 = pnand %p166, %p167
      %p169 = pneg %p168
      // Predicated region
      $region29: #{tpu_custom_call.1} parent=5 // pred_check
        _
      $region30: #{tpu_custom_call.1} parent=5 // pred_check_branch
        %171 = sbr.rel (%p168) target = $region32
      $region31: #{tpu_custom_call.1} parent=5 // pred_region
        %s172 = ssub.s32 %s16, 1
        %s173 = sand.u32 %s29, 1
        %s174 = scalar_lea.sflag [#allocation3], %s173
        %s175 = sand.u32 %s29, 1
        %s176 = smul.addr %s175, 40
        %s177 = scalar_lea.vmem [#allocation2], %s176
        // Predicated region
        $region33: #{tpu_custom_call.1} parent=31 // pred_check
          %p178 = pneg %p42
        $region34: #{tpu_custom_call.1} parent=31 // pred_check_branch
          %180 = sbr.rel (%p178) target = $region36
        $region35: #{tpu_custom_call.1} parent=31 // pred_region
          %181 = dma.done %s174, 640
        $region36: #{tpu_custom_call.1} parent=31 // pred_fallthru
          _
        // Predicated region
        $region37: #{tpu_custom_call.1} parent=31 // pred_check
          %p182 = pneg %p63
        $region38: #{tpu_custom_call.1} parent=31 // pred_check_branch
          %184 = sbr.rel (%p182) target = $region40
        $region39: #{tpu_custom_call.1} parent=31 // pred_region
          %185 = dma.done [#allocation6], 1024
        $region40: #{tpu_custom_call.1} parent=31 // pred_fallthru
          _
        %s186 = sand.u32 %s29, 1
        %s187 = scalar_lea.sflag [#allocation3], %s186
        %s188 = sand.u32 %s29, 1
        %s189 = smul.addr %s188, 40
        %s190 = scalar_lea.vmem [#allocation2], %s189
        %p191 = pneg %p42
        %p192 = pneg %p39
        %p193 = pneg %p63
        %p194 = pneg %p60
        %p195 = pneg %p84
        %p196 = pneg %p81
        %p197 = pneg %p110
        %p198 = pneg %p107
        %s199 = sand.u32 %s97, 1
        %s200 = scalar_lea.sflag [#allocation4], %s199
        %s201 = sand.u32 %s97, 1
        %s202 = smul.addr %s201, 40
        %s203 = scalar_lea.vmem [#allocation7], %s202
        %s204 = smul.u32 10, %s21
        %s205 = smul.u32 10, %s21
        %v207 = vld [vmem:[%s177] sm:$0xf]
        %v208 = vld [vmem:[%s177 + $0x4] sm:$0xf]
        %v209 = vld [vmem:[%s177 + $0x8] sm:$0xf]
        %v210 = vld [vmem:[%s177 + $0xc] sm:$0xf]
        %v211 = vld [vmem:[%s177 + $0x10] sm:$0xf]
        %v212 = vld [vmem:[%s177 + $0x14] sm:$0xf]
        %v213 = vld [vmem:[%s177 + $0x18] sm:$0xf]
        %v214 = vld [vmem:[%s177 + $0x1c] sm:$0xf]
        %v215 = vld [vmem:[%s177 + $0x20] sm:$0xf]
        %v216 = vld [vmem:[%s177 + $0x24] sm:$0xf]
        %v217 = vld [vmem:[#allocation5] sm:$0xf]
        %v218 = vld [vmem:[#allocation5 + $0x4] sm:$0xf]
        %v219 = vld [vmem:[#allocation5 + $0x8] sm:$0xf]
        %v220 = vld [vmem:[#allocation5 + $0xc] sm:$0xf]
        %v221 = vld [vmem:[#allocation5 + $0x10] sm:$0xf]
        %v222 = vld [vmem:[#allocation5 + $0x14] sm:$0xf]
        %v223 = vld [vmem:[#allocation5 + $0x18] sm:$0xf]
        %v224 = vld [vmem:[#allocation5 + $0x1c] sm:$0xf]
        %v225 = vld [vmem:[#allocation5 + $0x20] sm:$0xf]
        %v226 = vld [vmem:[#allocation5 + $0x24] sm:$0xf]
        %v227 = vld [vmem:[#allocation5 + $0x28] sm:$0xf]
        %v228 = vld [vmem:[#allocation5 + $0x2c] sm:$0xf]
        %v229 = vld [vmem:[#allocation5 + $0x30] sm:$0xf]
        %v230 = vld [vmem:[#allocation5 + $0x34] sm:$0xf]
        %v231 = vld [vmem:[#allocation5 + $0x38] sm:$0xf]
        %v232 = vld [vmem:[#allocation5 + $0x3c] sm:$0xf]
        %v233 = vld [vmem:[%s2] sm:$0x1]
        %v235 = vlaneseq
        %v236 = vshrl.u32 %v235, 7
        %v237 = vsub.s32 0, %v236
        %v238 = vrot.slane %v233, %v237
        %v250 = vunpack.c.l.b16 %v207
        %v251 = vunpack.c.l.b16 %v208
        %v252 = vunpack.c.l.b16 %v209
        %v253 = vunpack.c.l.b16 %v210
        %v254 = vunpack.c.l.b16 %v211
        %v255 = vunpack.c.l.b16 %v212
        %v256 = vunpack.c.l.b16 %v213
        %v257 = vunpack.c.l.b16 %v214
        %v258 = vunpack.c.l.b16 %v215
        %v259 = vunpack.c.l.b16 %v216
        %v260 = vpack.c.b16 %v251, %v250
        %v261 = vpack.c.b16 %v253, %v252
        %v262 = vpack.c.b16 %v255, %v254
        %v263 = vpack.c.b16 %v257, %v256
        %v264 = vpack.c.b16 %v259, %v258
        %v286 = vunpack.c.l.b16 %v217
        %v287 = vunpack.c.l.b16 %v218
        %v288 = vunpack.c.l.b16 %v219
        %v289 = vunpack.c.l.b16 %v220
        %v290 = vunpack.c.l.b16 %v221
        %v291 = vunpack.c.l.b16 %v222
        %v292 = vunpack.c.l.b16 %v223
        %v293 = vunpack.c.l.b16 %v224
        %v294 = vunpack.c.l.b16 %v225
        %v295 = vunpack.c.l.b16 %v226
        %v296 = vunpack.c.l.b16 %v227
        %v297 = vunpack.c.l.b16 %v228
        %v298 = vunpack.c.l.b16 %v229
        %v299 = vunpack.c.l.b16 %v230
        %v300 = vunpack.c.l.b16 %v231
        %v301 = vunpack.c.l.b16 %v232
        %v302 = vpack.c.b16 %v287, %v286
        %v303 = vpack.c.b16 %v289, %v288
        %v304 = vpack.c.b16 %v291, %v290
        %v305 = vpack.c.b16 %v293, %v292
        %v306 = vpack.c.b16 %v295, %v294
        %v307 = vpack.c.b16 %v297, %v296
        %v308 = vpack.c.b16 %v299, %v298
        %v309 = vpack.c.b16 %v301, %v300
        %318 = vmatprep.subr.bf16.mxu0 0
        %319 = vmatpush1.bf16.msra.mxu0 %v302
        %320 = vmatprep.subr.bf16.mxu0 0
        %321 = vmatpush1.bf16.msra.mxu0 %v303
        %322 = vmatprep.subr.bf16.mxu0 0
        %323 = vmatpush1.bf16.msra.mxu0 %v304
        %324 = vmatprep.subr.bf16.mxu0 0
        %325 = vmatpush1.bf16.msra.mxu0 %v305
        %326 = vmatprep.subr.bf16.mxu0 0
        %327 = vmatpush1.bf16.msra.mxu0 %v306
        %328 = vmatprep.subr.bf16.mxu0 0
        %329 = vmatpush1.bf16.msra.mxu0 %v307
        %330 = vmatprep.subr.bf16.mxu0 0
        %331 = vmatpush1.bf16.msra.mxu0 %v308
        %332 = vmatprep.subr.bf16.mxu0 0
        %333 = vmatpush1.bf16.msra.mxu0 %v309
        %334 = vmatprep.subr.bf16.mxu0 0
        %335 = vmatpush1.bf16.msra.mxu0 0
        %336 = vmatprep.subr.bf16.mxu0 0
        %337 = vmatpush1.bf16.msra.mxu0 0
        %338 = vmatprep.subr.bf16.mxu0 0
        %339 = vmatpush1.bf16.msra.mxu0 0
        %340 = vmatprep.subr.bf16.mxu0 0
        %341 = vmatpush1.bf16.msra.mxu0 0
        %342 = vmatprep.subr.bf16.mxu0 0
        %343 = vmatpush1.bf16.msra.mxu0 0
        %344 = vmatprep.subr.bf16.mxu0 0
        %345 = vmatpush1.bf16.msra.mxu0 0
        %346 = vmatprep.subr.bf16.mxu0 0
        %347 = vmatpush1.bf16.msra.mxu0 0
        %348 = vmatprep.subr.bf16.mxu0 0
        %349 = vmatpush1.bf16.msra.mxu0 0
        %350 = vmatprep.mubr.bf16.mxu0 0
        %351 = vmatmul.mubr.bf16.gmra.mrb[0].mxu0 %v260
        %v352 = vpop.f32.mrb[0].mxu0
        %v353 = vadd.f32 %v238, %v352
        %v354 = vpop.f32.mrb[0].mxu0
        %v355 = vpop.f32.mrb[0].mxu0
        %v356 = vadd.f32 %v238, %v355
        %v357 = vpop.f32.mrb[0].mxu0
        %358 = vmatprep.mubr.bf16.mxu0 0
        %359 = vmatmul.mubr.bf16.gmra.mrb[0].mxu0 %v261
        %v360 = vpop.f32.mrb[0].mxu0
        %v361 = vadd.f32 %v238, %v360
        %v362 = vpop.f32.mrb[0].mxu0
        %v363 = vpop.f32.mrb[0].mxu0
        %v364 = vadd.f32 %v238, %v363
        %v365 = vpop.f32.mrb[0].mxu0
        %366 = vmatprep.mubr.bf16.mxu0 0
        %367 = vmatmul.mubr.bf16.gmra.mrb[0].mxu0 %v262
        %v368 = vpop.f32.mrb[0].mxu0
        %v369 = vadd.f32 %v238, %v368
        %v370 = vpop.f32.mrb[0].mxu0
        %v371 = vpop.f32.mrb[0].mxu0
        %v372 = vadd.f32 %v238, %v371
        %v373 = vpop.f32.mrb[0].mxu0
        %374 = vmatprep.mubr.bf16.mxu0 0
        %375 = vmatmul.mubr.bf16.gmra.mrb[0].mxu0 %v263
        %v376 = vpop.f32.mrb[0].mxu0
        %v377 = vadd.f32 %v238, %v376
        %v378 = vpop.f32.mrb[0].mxu0
        %v379 = vpop.f32.mrb[0].mxu0
        %v380 = vadd.f32 %v238, %v379
        %v381 = vpop.f32.mrb[0].mxu0
        %382 = vmatprep.mubr.bf16.mxu0 0
        %383 = vmatmul.mubr.bf16.gmra.mrb[0].mxu0 %v264
        %v384 = vpop.f32.mrb[0].mxu0
        %v385 = vadd.f32 %v238, %v384
        %v386 = vpop.f32.mrb[0].mxu0
        %v387 = vpop.f32.mrb[0].mxu0
        %v388 = vadd.f32 %v238, %v387
        %v389 = vpop.f32.mrb[0].mxu0
        %390 = vdwg.mxu0
        %v391 = vtanh.pop %v353
        %v392 = vtanh.pop %v356
        %v393 = vtanh.pop %v361
        %v394 = vtanh.pop %v364
        %v395 = vtanh.pop %v369
        %v396 = vtanh.pop %v372
        %v397 = vtanh.pop %v377
        %v398 = vtanh.pop %v380
        %v399 = vtanh.pop %v385
        %v400 = vtanh.pop %v388
        %v401 = vpack.c.bf16 %v392, %v391
        %v402 = vpack.c.bf16 %v394, %v393
        %v403 = vpack.c.bf16 %v396, %v395
        %v404 = vpack.c.bf16 %v398, %v397
        %v405 = vpack.c.bf16 %v400, %v399
        %v411 = vunpack.c.l.b16 %v401
        %v412 = vunpack.c.h.b16 %v401
        %v413 = vunpack.c.l.b16 %v402
        %v414 = vunpack.c.h.b16 %v402
        %v415 = vunpack.c.l.b16 %v403
        %v416 = vunpack.c.h.b16 %v403
        %v417 = vunpack.c.l.b16 %v404
        %v418 = vunpack.c.h.b16 %v404
        %v419 = vunpack.c.l.b16 %v405
        %v420 = vunpack.c.h.b16 %v405
        %v421 = vpack.c.b16 %v411, %v411
        %v422 = vpack.c.b16 %v412, %v412
        %v423 = vpack.c.b16 %v413, %v413
        %v424 = vpack.c.b16 %v414, %v414
        %v425 = vpack.c.b16 %v415, %v415
        %v426 = vpack.c.b16 %v416, %v416
        %v427 = vpack.c.b16 %v417, %v417
        %v428 = vpack.c.b16 %v418, %v418
        %v429 = vpack.c.b16 %v419, %v419
        %v430 = vpack.c.b16 %v420, %v420
        %441 = vst [vmem:[%s203] sm:$0xf] %v421
        %442 = vst [vmem:[%s203 + $0x4] sm:$0xf] %v422
        %443 = vst [vmem:[%s203 + $0x8] sm:$0xf] %v423
        %444 = vst [vmem:[%s203 + $0xc] sm:$0xf] %v424
        %445 = vst [vmem:[%s203 + $0x10] sm:$0xf] %v425
        %446 = vst [vmem:[%s203 + $0x14] sm:$0xf] %v426
        %447 = vst [vmem:[%s203 + $0x18] sm:$0xf] %v427
        %448 = vst [vmem:[%s203 + $0x1c] sm:$0xf] %v428
        %449 = vst [vmem:[%s203 + $0x20] sm:$0xf] %v429
        %450 = vst [vmem:[%s203 + $0x24] sm:$0xf] %v430
        %s451 = sand.u32 %s97, 1
        %s452 = scalar_lea.sflag [#allocation4], %s451
        %s453 = sand.u32 %s97, 1
        %s454 = smul.addr %s453, 40
        %s455 = scalar_lea.vmem [#allocation7], %s454
        // Predicated region
        $region41: #{tpu_custom_call.1} parent=31 // pred_check
          %p456 = pneg %p107
        $region42: #{tpu_custom_call.1} parent=31 // pred_check_branch
          %458 = sbr.rel (%p456) target = $region44
        $region43: #{tpu_custom_call.1} parent=31 // pred_region
          %s459 = smul.u32 10, %s21
          %s461 = ssub.s32 640, 640
          %462 = vsyncadd %s452, %s461
          %s463 = smul.addr %s459, 64
          %s464 = scalar_lea.hbm %s3, %s463
          %s465 = sshll.u32 %s455, 4
          %s466 = int_to_ptr.vmem [resolvable:$true] %s465
          %471 = dma.vmem_to_hbm [thread:$0]  %s466, 640, %s464, %s452, 64, 64, 4
        $region44: #{tpu_custom_call.1} parent=31 // pred_fallthru
          _
      $region32: #{tpu_custom_call.1} parent=5 // pred_fallthru
        _
      %p472 = scmp.le.s32.totalorder 2, %s16
      // Predicated region
      $region45: #{tpu_custom_call.1} parent=5 // pred_check
        %p473 = pneg %p472
      $region46: #{tpu_custom_call.1} parent=5 // pred_check_branch
        %475 = sbr.rel (%p473) target = $region48
      $region47: #{tpu_custom_call.1} parent=5 // pred_region
        %s476 = ssub.s32 %s16, 2
        // Predicated region
        $region49: #{tpu_custom_call.1} parent=47 // pred_check
          %p477 = pneg %p113
        $region50: #{tpu_custom_call.1} parent=47 // pred_check_branch
          %479 = sbr.rel (%p477) target = $region52
        $region51: #{tpu_custom_call.1} parent=47 // pred_region
          %s480 = sand.u32 %s98, 1
          %s481 = scalar_lea.sflag [#allocation4], %s480
          %s482 = sand.u32 %s98, 1
          %s483 = smul.addr %s482, 40
          %s484 = scalar_lea.vmem [#allocation7], %s483
          %485 = dma.done %s481, 640
        $region52: #{tpu_custom_call.1} parent=47 // pred_fallthru
          _
      $region48: #{tpu_custom_call.1} parent=5 // pred_fallthru
        _
    $region6: #{tpu_custom_call.1} parent=1 // loop_footer
      %s20 = sadd.s32 1, %s16
    $region7: #{tpu_custom_call.1} parent=1 // loop_footer_branch
      %15 = sbr.rel target = $region3
    $region8: #{tpu_custom_call.1} parent=1 // loop_exit
      _
    %486 = vsyncpa [#allocation3], 1
    %s487 = scalar_lea.sflag [#allocation3], 1
    %488 = vsyncpa %s487, 1
    %489 = vsyncpa [#allocation6], 1
    %490 = vsyncpa [#allocation4], 1
    %s491 = scalar_lea.sflag [#allocation4], 1
    %492 = vsyncpa %s491, 1

</llo_original>
